<compile_context>
chip_gen: v6e
topology: v6e:2x2x1
jax: 0.10.0
libtpu: 0.0.40
codegen_flags: <defaults>
</compile_context>

<pallas_src>
import jax
import jax.numpy as jnp
from jax.experimental import pallas as pl
from jax.experimental.pallas import tpu as pltpu

_LANES = 128
_TARGET_BLOCK_BYTES = 4 << 20      # per-input, per-step DMA target
_MIN_KERNEL_BYTES = 256 * 1024     # below this, plain jnp beats the kernel


def _tensorcore_split():
    """Returns (num_cores, semantics-for-core-axis) for the leading grid axis."""
    try:
        kind = (jax.devices()[0].device_kind or "").lower()
    except Exception:
        return 1, "arbitrary"
    if "7" in kind:
        # v7x: 2 TensorCores per chip; only CORE_PARALLEL actually shards the
        # grid axis across them (plain "parallel" does not change codegen).
        return 2, getattr(pltpu, "CORE_PARALLEL", "parallel")
    # v5e / v6e (and anything unknown): single TensorCore — a fake core split
    # only adds masked redundant work, so collapse the axis.
    return 1, "arbitrary"


def _make_kernel(rows, block_rows, steps_per_core, need_mask):
    def kernel(p_ref, t_ref, o_ref, acc_ref):
        i = pl.program_id(1)

        @pl.when(i == 0)
        def _():
            acc_ref[...] = jnp.zeros_like(acc_ref)

        d = p_ref[...].astype(jnp.float32) - t_ref[...].astype(jnp.float32)
        sq = d * d

        if need_mask:
            # Invariant: need_mask is True exactly when partial or clamped
            # (overhanging) blocks exist, i.e. rows != cores*steps*block_rows.
            c = pl.program_id(0)
            block_idx = c * steps_per_core + i
            is_full = (block_idx + 1) * block_rows <= rows

            @pl.when(is_full)
            def _():
                acc_ref[...] += jnp.sum(sq, axis=0, keepdims=True)

            @pl.when(jnp.logical_not(is_full))
            def _():
                # Only the final (partial) block and fully-overhanging clamped
                # blocks pay the iota + compare + select cost.
                row_ids = block_idx * block_rows + jax.lax.broadcasted_iota(
                    jnp.int32, (block_rows, _LANES), 0)
                masked = jnp.where(row_ids < rows, sq, 0.0)
                acc_ref[...] += jnp.sum(masked, axis=0, keepdims=True)
        else:
            acc_ref[...] += jnp.sum(sq, axis=0, keepdims=True)

        @pl.when(i == pl.num_programs(1) - 1)
        def _():
            o_ref[0] = acc_ref[...]

    return kernel


def rmsd_loss(predictions, targets, *, block_bytes=_TARGET_BLOCK_BYTES,
              min_kernel_bytes=_MIN_KERNEL_BYTES):
    assert predictions.shape == targets.shape
    n_elems = predictions.size
    if n_elems == 0:
        return jnp.float32(float("nan"))   # matches torch: mean of empty is nan

    itemsize = jnp.dtype(predictions.dtype).itemsize
    n_bytes = n_elems * itemsize

    # Small-input fast path: pallas_call fixed cost dominates, XLA fusion wins.
    if n_bytes < min_kernel_bytes:
        d = predictions.astype(jnp.float32) - targets.astype(jnp.float32)
        return jnp.sqrt(jnp.mean(d * d))

    p = predictions.reshape(-1)
    t = targets.reshape(-1)

    rem = n_elems % _LANES
    if rem:
        # Zero pad both operands to a lane multiple; zeros add 0 to the sum.
        pad = _LANES - rem
        p = jnp.pad(p, (0, pad))
        t = jnp.pad(t, (0, pad))

    rows = p.size // _LANES
    p2 = p.reshape(rows, _LANES)
    t2 = t.reshape(rows, _LANES)

    # Byte-based block sizing: same DMA bytes per step regardless of dtype.
    max_block_rows = max(8, (block_bytes // (_LANES * itemsize)) // 8 * 8)
    block_rows = rows if rows <= max_block_rows else max_block_rows

    num_cores, core_sem = _tensorcore_split()
    total_blocks = -(-rows // block_rows)
    if num_cores > total_blocks:
        num_cores, core_sem = 1, "arbitrary"     # not enough blocks to split
    steps_per_core = -(-total_blocks // num_cores)
    need_mask = rows != num_cores * steps_per_core * block_rows
    # need_mask must be True whenever clamped/partial blocks exist.
    assert need_mask or (rows == total_blocks * block_rows
                         and total_blocks == num_cores * steps_per_core)

    def in_index_map(c, i):
        # Clamp so a core/step past the real block count re-reads the last
        # valid block; its contribution is masked to zero inside the kernel.
        return (jnp.minimum(c * steps_per_core + i, total_blocks - 1), 0)

    kernel = _make_kernel(rows, block_rows, steps_per_core, need_mask)

    block_in_bytes = block_rows * _LANES * itemsize
    # 2 inputs x 2 pipeline buffers + scratch/output + headroom; above the
    # 16 MiB v5e scoped default, well under physical VMEM on all generations.
    vmem_limit = min(64 << 20, max(32 << 20, 4 * block_in_bytes + (4 << 20)))

    partials = pl.pallas_call(
        kernel,
        out_shape=jax.ShapeDtypeStruct((num_cores, 1, _LANES), jnp.float32),
        grid_spec=pltpu.PrefetchScalarGridSpec(
            num_scalar_prefetch=0,
            grid=(num_cores, steps_per_core),
            in_specs=[
                pl.BlockSpec((block_rows, _LANES), in_index_map),
                pl.BlockSpec((block_rows, _LANES), in_index_map),
            ],
            out_specs=pl.BlockSpec((1, 1, _LANES), lambda c, i: (c, 0, 0)),
            scratch_shapes=[pltpu.VMEM((1, _LANES), jnp.float32)],
        ),
        compiler_params=pltpu.CompilerParams(
            dimension_semantics=(core_sem, "arbitrary"),
            vmem_limit_bytes=vmem_limit,
        ),
    )(p2, t2)

    inv_n = 1.0 / float(n_elems)   # exact trace-time constant; multiply, not divide
    return jnp.sqrt(jnp.sum(partials) * inv_n)


if __name__ == "__main__":
    key = jax.random.PRNGKey(0)
    k1, k2, k3, k4, k5, k6 = jax.random.split(key, 6)

    def ref_rmsd(p, t):
        return jnp.sqrt(jnp.mean((p.astype(jnp.float32) - t.astype(jnp.float32)) ** 2))

    # 1) Small NCHW-like shape consistent with the module's generic usage
    #    (takes the small-input fast path).
    shape_small = (2, 4, 16, 16)
    p_s = jax.random.normal(k1, shape_small, dtype=jnp.float32)
    t_s = jax.random.normal(k2, shape_small, dtype=jnp.float32)
    loss_s = jax.block_until_ready(rmsd_loss(p_s, t_s))
    assert jnp.allclose(loss_s, ref_rmsd(p_s, t_s), rtol=1e-5, atol=1e-6), loss_s

    # 2) Medium shape that exercises the Pallas streaming kernel (full blocks).
    shape_med = (2, 4, 128, 128)
    p_m = jax.random.normal(k3, shape_med, dtype=jnp.float32)
    t_m = jax.random.normal(k4, shape_med, dtype=jnp.float32)
    loss_m = jax.block_until_ready(rmsd_loss(p_m, t_m))
    assert jnp.allclose(loss_m, ref_rmsd(p_m, t_m), rtol=1e-5, atol=1e-6), loss_m

    # 3) Ragged element count + small forced block size to exercise the
    #    masked final-block path inside the kernel.
    shape_rag = (2, 3, 67, 65)
    p_r = jax.random.normal(k5, shape_rag, dtype=jnp.float32)
    t_r = jax.random.normal(k6, shape_rag, dtype=jnp.float32)
    loss_r = jax.block_until_ready(
        rmsd_loss(p_r, t_r, block_bytes=64 * 1024, min_kernel_bytes=0))
    assert jnp.allclose(loss_r, ref_rmsd(p_r, t_r), rtol=1e-5, atol=1e-6), loss_r

    print("KERNEL_OK")
</pallas_src>

<mosaic_0001>
module attributes {stable_mosaic.version = 11 : i64} {
  func.func @kernel(%arg0: i32, %arg1: i32, %arg2: memref<1024x128xf32, #tpu.memory_space<vmem>>, %arg3: memref<1024x128xf32, #tpu.memory_space<vmem>>, %arg4: memref<1x1x128xf32, #tpu.memory_space<vmem>>, %arg5: memref<1x128xf32, #tpu.memory_space<vmem>>) attributes {dimension_semantics = [#tpu.dimension_semantics<arbitrary>, #tpu.dimension_semantics<arbitrary>], iteration_bounds = array<i64: 1, 1>, scalar_prefetch = 0 : i64, scratch_operands = 1 : i64, tpu.core_type = #tpu.core_type<tc>, window_params = [{transform_indices = @transform_0, window_bounds = array<i64: 1024, 128>}, {transform_indices = @transform_1, window_bounds = array<i64: 1024, 128>}, {transform_indices = @transform_2, window_bounds = array<i64: 1, 1, 128>}]} {
    %c0_i32 = arith.constant 0 : i32
    %0 = arith.cmpi eq, %arg1, %c0_i32 : i32
    %1 = arith.extui %0 : i1 to i32
    %c0_i32_0 = arith.constant 0 : i32
    %2 = arith.cmpi ne, %1, %c0_i32_0 : i32
    scf.if %2 {
      %cst_10 = arith.constant 0.000000e+00 : f32
      %15 = vector.broadcast %cst_10 : f32 to vector<1x128xf32>
      %c0_11 = arith.constant 0 : index
      %c0_12 = arith.constant 0 : index
      %16 = vector.load %arg5[%c0_11, %c0_12] : memref<1x128xf32, #tpu.memory_space<vmem>>, vector<1x128xf32>
      tpu.vector_store %arg5[%c0_11, %c0_12], %15 {strides = array<i32>} : memref<1x128xf32, #tpu.memory_space<vmem>>, vector<1x128xf32>,
    } else {
    }
    %c0 = arith.constant 0 : index
    %c0_1 = arith.constant 0 : index
    %3 = vector.load %arg2[%c0, %c0_1] : memref<1024x128xf32, #tpu.memory_space<vmem>>, vector<1024x128xf32>
    %c0_2 = arith.constant 0 : index
    %c0_3 = arith.constant 0 : index
    %4 = vector.load %arg3[%c0_2, %c0_3] : memref<1024x128xf32, #tpu.memory_space<vmem>>, vector<1024x128xf32>
    %5 = arith.subf %3, %4 : vector<1024x128xf32>
    %6 = arith.mulf %5, %5 : vector<1024x128xf32>
    %c0_4 = arith.constant 0 : index
    %c0_5 = arith.constant 0 : index
    %7 = vector.load %arg5[%c0_4, %c0_5] : memref<1x128xf32, #tpu.memory_space<vmem>>, vector<1x128xf32>
    %cst = arith.constant dense<0.000000e+00> : vector<128xf32>
    %8 = vector.multi_reduction <add>, %6, %cst [0] : vector<1024x128xf32> to vector<128xf32>
    %9 = vector.shape_cast %8 : vector<128xf32> to vector<1x128xf32>
    %10 = arith.addf %7, %9 : vector<1x128xf32>
    %c0_6 = arith.constant 0 : index
    %c0_7 = arith.constant 0 : index
    %11 = vector.load %arg5[%c0_6, %c0_7] : memref<1x128xf32, #tpu.memory_space<vmem>>, vector<1x128xf32>
    tpu.vector_store %arg5[%c0_6, %c0_7], %10 {strides = array<i32>} : memref<1x128xf32, #tpu.memory_space<vmem>>, vector<1x128xf32>,
    %c0_i32_8 = arith.constant 0 : i32
    %12 = arith.cmpi eq, %arg1, %c0_i32_8 : i32
    %13 = arith.extui %12 : i1 to i32
    %c0_i32_9 = arith.constant 0 : i32
    %14 = arith.cmpi ne, %13, %c0_i32_9 : i32
    scf.if %14 {
      %c0_10 = arith.constant 0 : index
      %c0_11 = arith.constant 0 : index
      %15 = vector.load %arg5[%c0_10, %c0_11] : memref<1x128xf32, #tpu.memory_space<vmem>>, vector<1x128xf32>
      %c0_12 = arith.constant 0 : index
      %c0_13 = arith.constant 0 : index
      %c0_14 = arith.constant 0 : index
      %16 = vector.load %arg4[%c0_12, %c0_13, %c0_14] : memref<1x1x128xf32, #tpu.memory_space<vmem>>, vector<1x1x128xf32>
      %17 = vector.shape_cast %16 : vector<1x1x128xf32> to vector<1x128xf32>
      %18 = vector.shape_cast %15 : vector<1x128xf32> to vector<1x1x128xf32>
      tpu.vector_store %arg4[%c0_12, %c0_13, %c0_14], %18 {strides = array<i32>} : memref<1x1x128xf32, #tpu.memory_space<vmem>>, vector<1x1x128xf32>,
    } else {
    }
    return
  }
  func.func @transform_0(%arg0: i32, %arg1: i32) -> (i32, i32) {
    %c1_i32 = arith.constant 1 : i32
    %0 = arith.muli %arg0, %c1_i32 : i32
    %1 = arith.addi %0, %arg1 : i32
    %c0_i32 = arith.constant 0 : i32
    %2 = arith.minsi %1, %c0_i32 : i32
    %c0_i32_0 = arith.constant 0 : i32
    %c0_i32_1 = arith.constant 0 : i32
    return %2, %c0_i32_0 : i32, i32
  }
  func.func @transform_1(%arg0: i32, %arg1: i32) -> (i32, i32) {
    %c1_i32 = arith.constant 1 : i32
    %0 = arith.muli %arg0, %c1_i32 : i32
    %1 = arith.addi %0, %arg1 : i32
    %c0_i32 = arith.constant 0 : i32
    %2 = arith.minsi %1, %c0_i32 : i32
    %c0_i32_0 = arith.constant 0 : i32
    %c0_i32_1 = arith.constant 0 : i32
    return %2, %c0_i32_0 : i32, i32
  }
  func.func @transform_2(%arg0: i32, %arg1: i32) -> (i32, i32, i32) {
    %c0_i32 = arith.constant 0 : i32
    %c0_i32_0 = arith.constant 0 : i32
    %c0_i32_1 = arith.constant 0 : i32
    return %arg0, %c0_i32, %c0_i32_0 : i32, i32, i32
  }
}

</mosaic_0001>

<llo_original>
// kernel: tpu_custom_call.1
$region0: #{tpu_custom_call.1}
  #allocation0 [shape = 'u32[]', space=smem, size = 0x4, offset = 0x4, fixed_abs, tag = 'smem constant byte address 0x4 - core index']
  #allocation1 [shape = 'u32[144,128]{1,0:T(1,128)}', space=vmem, size = 0x12000, scoped, tag = 'internal scratch']
  #allocation2 [shape = 'f32[1,128]{1,0:T(1,128)}', space=vmem, size = 0x200, scoped, tag = 'scratch operand']
  %s0 = inlined_call_operand.hbm [shape: f32[1024,128], index: 0, kind: input, shape index: {}]
  %s1 = inlined_call_operand.hbm [shape: f32[1024,128], index: 1, kind: input, shape index: {}]
  %s2 = inlined_call_operand.hbm [shape: f32[1,1,128], index: 2, kind: output, shape index: {}]
  %s3 = sld [smem:[#allocation0]]
  $region34: #{tpu_custom_call.1} parent=0
    _
  %s5 = ssub.s32 1, %s3
  %s6 = scalar_select 0, %s5, %s3
  $region1: #{tpu_custom_call.1} parent=0
    #allocation3 [shape = 'u8[524288]{0}', space=vmem, size = 0x80000, scoped, tag = 'input window, operand 0, single buffered']
    #allocation4 [shape = 's32[1]{0}', space=sflag, size = 0x4, scoped, tag = 'scoped memory for tpu_custom_call.1']
    #allocation5 [shape = 's32[1]{0}', space=sflag, size = 0x4, scoped, tag = 'scoped memory for tpu_custom_call.1']
    #allocation6 [shape = 'u8[524288]{0}', space=vmem, size = 0x80000, scoped, tag = 'input window, operand 1, single buffered']
    #allocation7 [shape = 's32[1]{0}', space=sflag, size = 0x4, scoped, tag = 'scoped memory for tpu_custom_call.1']
    #allocation8 [shape = 'u8[512]{0}', space=vmem, size = 0x400, scoped, tag = 'output window, operand 0, single buffered']
    %7 = vsyncpa [#allocation4], 0
    %8 = vsyncpa [#allocation7], 0
    %9 = vsyncpa [#allocation5], 0
    // Predicated region
    $region2: #{tpu_custom_call.1} parent=1 // pred_check
      _
    $region3: #{tpu_custom_call.1} parent=1 // pred_check_branch
      %11 = sbr.rel (0) target = $region5
    $region4: #{tpu_custom_call.1} parent=1 // pred_region
      %s12 = sadd.s32 0, 0
      %p13 = scmp.lt.s32.totalorder %s12, 0
      %s14 = scalar_select %p13, %s12, 0
      %s15 = smul.u32 128, %s14
      %s17 = ssub.s32 16384, 16384
      %18 = vsyncadd [#allocation4], %s17
      %s19 = smul.addr %s15, 128
      %s20 = scalar_lea.hbm %s0, %s19
      %s21 = sshll.u32 [#allocation3], 4
      %s22 = int_to_ptr.vmem [resolvable:$true] %s21
      %27 = dma.hbm_to_vmem [thread:$0]  %s20, 16384, %s22, [#allocation4], 128, 128, 8
    $region5: #{tpu_custom_call.1} parent=1 // pred_fallthru
      _
    // Predicated region
    $region6: #{tpu_custom_call.1} parent=1 // pred_check
      _
    $region7: #{tpu_custom_call.1} parent=1 // pred_check_branch
      %29 = sbr.rel (0) target = $region9
    $region8: #{tpu_custom_call.1} parent=1 // pred_region
      %s30 = sadd.s32 0, 0
      %p31 = scmp.lt.s32.totalorder %s30, 0
      %s32 = scalar_select %p31, %s30, 0
      %s33 = smul.u32 128, %s32
      %s35 = ssub.s32 16384, 16384
      %36 = vsyncadd [#allocation7], %s35
      %s37 = smul.addr %s33, 128
      %s38 = scalar_lea.hbm %s1, %s37
      %s39 = sshll.u32 [#allocation6], 4
      %s40 = int_to_ptr.vmem [resolvable:$true] %s39
      %45 = dma.hbm_to_vmem [thread:$0]  %s38, 16384, %s40, [#allocation7], 128, 128, 8
    $region9: #{tpu_custom_call.1} parent=1 // pred_fallthru
      _
    // Predicated region
    $region10: #{tpu_custom_call.1} parent=1 // pred_check
      _
    $region11: #{tpu_custom_call.1} parent=1 // pred_check_branch
      %47 = sbr.rel (0) target = $region13
    $region12: #{tpu_custom_call.1} parent=1 // pred_region
      %48 = dma.done [#allocation4], 16384
    $region13: #{tpu_custom_call.1} parent=1 // pred_fallthru
      _
    // Predicated region
    $region14: #{tpu_custom_call.1} parent=1 // pred_check
      _
    $region15: #{tpu_custom_call.1} parent=1 // pred_check_branch
      %50 = sbr.rel (0) target = $region17
    $region16: #{tpu_custom_call.1} parent=1 // pred_region
      %51 = dma.done [#allocation7], 16384
    $region17: #{tpu_custom_call.1} parent=1 // pred_fallthru
      _
    %s52 = sadd.s32 0, 0
    %p53 = scmp.lt.s32.totalorder %s52, 0
    %s54 = scalar_select %p53, %s52, 0
    %s55 = smul.u32 128, %s54
    %s56 = sadd.s32 0, 0
    %p57 = scmp.lt.s32.totalorder %s56, 0
    %s58 = scalar_select %p57, %s56, 0
    %s59 = smul.u32 128, %s58
    %p60 = scmp.eq.s32.totalorder 0, 0
    // Predicated region
    $region18: #{tpu_custom_call.1} parent=1 // pred_check
      %p61 = pneg %p60
    $region19: #{tpu_custom_call.1} parent=1 // pred_check_branch
      %63 = sbr.rel (%p61) target = $region21
    $region20: #{tpu_custom_call.1} parent=1 // pred_region
      %64 = vst [vmem:[#allocation2] sm:$0x1] 0.0
    $region21: #{tpu_custom_call.1} parent=1 // pred_fallthru
      _
    %v65 = vld [vmem:[#allocation3] sm:$0xff]
    %v66 = vld [vmem:[#allocation3 + $0x8] sm:$0xff]
    %v67 = vld [vmem:[#allocation3 + $0x10] sm:$0xff]
    %v68 = vld [vmem:[#allocation3 + $0x18] sm:$0xff]
    %v69 = vld [vmem:[#allocation3 + $0x20] sm:$0xff]
    %v70 = vld [vmem:[#allocation3 + $0x28] sm:$0xff]
    %v71 = vld [vmem:[#allocation3 + $0x30] sm:$0xff]
    %v72 = vld [vmem:[#allocation3 + $0x38] sm:$0xff]
    %v73 = vld [vmem:[#allocation3 + $0x40] sm:$0xff]
    %v74 = vld [vmem:[#allocation3 + $0x48] sm:$0xff]
    %v75 = vld [vmem:[#allocation3 + $0x50] sm:$0xff]
    %v76 = vld [vmem:[#allocation3 + $0x58] sm:$0xff]
    %v77 = vld [vmem:[#allocation3 + $0x60] sm:$0xff]
    %v78 = vld [vmem:[#allocation3 + $0x68] sm:$0xff]
    %v79 = vld [vmem:[#allocation3 + $0x70] sm:$0xff]
    %v80 = vld [vmem:[#allocation3 + $0x78] sm:$0xff]
    %v81 = vld [vmem:[#allocation3 + $0x80] sm:$0xff]
    %v82 = vld [vmem:[#allocation3 + $0x88] sm:$0xff]
    %v83 = vld [vmem:[#allocation3 + $0x90] sm:$0xff]
    %v84 = vld [vmem:[#allocation3 + $0x98] sm:$0xff]
    %v85 = vld [vmem:[#allocation3 + $0xa0] sm:$0xff]
    %v86 = vld [vmem:[#allocation3 + $0xa8] sm:$0xff]
    %v87 = vld [vmem:[#allocation3 + $0xb0] sm:$0xff]
    %v88 = vld [vmem:[#allocation3 + $0xb8] sm:$0xff]
    %v89 = vld [vmem:[#allocation3 + $0xc0] sm:$0xff]
    %v90 = vld [vmem:[#allocation3 + $0xc8] sm:$0xff]
    %v91 = vld [vmem:[#allocation3 + $0xd0] sm:$0xff]
    %v92 = vld [vmem:[#allocation3 + $0xd8] sm:$0xff]
    %v93 = vld [vmem:[#allocation3 + $0xe0] sm:$0xff]
    %v94 = vld [vmem:[#allocation3 + $0xe8] sm:$0xff]
    %v95 = vld [vmem:[#allocation3 + $0xf0] sm:$0xff]
    %v96 = vld [vmem:[#allocation3 + $0xf8] sm:$0xff]
    %v97 = vld [vmem:[#allocation3 + $0x100] sm:$0xff]
    %v98 = vld [vmem:[#allocation3 + $0x108] sm:$0xff]
    %v99 = vld [vmem:[#allocation3 + $0x110] sm:$0xff]
    %v100 = vld [vmem:[#allocation3 + $0x118] sm:$0xff]
    %v101 = vld [vmem:[#allocation3 + $0x120] sm:$0xff]
    %v102 = vld [vmem:[#allocation3 + $0x128] sm:$0xff]
    %v103 = vld [vmem:[#allocation3 + $0x130] sm:$0xff]
    %v104 = vld [vmem:[#allocation3 + $0x138] sm:$0xff]
    %v105 = vld [vmem:[#allocation3 + $0x140] sm:$0xff]
    %v106 = vld [vmem:[#allocation3 + $0x148] sm:$0xff]
    %v107 = vld [vmem:[#allocation3 + $0x150] sm:$0xff]
    %v108 = vld [vmem:[#allocation3 + $0x158] sm:$0xff]
    %v109 = vld [vmem:[#allocation3 + $0x160] sm:$0xff]
    %v110 = vld [vmem:[#allocation3 + $0x168] sm:$0xff]
    %v111 = vld [vmem:[#allocation3 + $0x170] sm:$0xff]
    %v112 = vld [vmem:[#allocation3 + $0x178] sm:$0xff]
    %v113 = vld [vmem:[#allocation3 + $0x180] sm:$0xff]
    %v114 = vld [vmem:[#allocation3 + $0x188] sm:$0xff]
    %v115 = vld [vmem:[#allocation3 + $0x190] sm:$0xff]
    %v116 = vld [vmem:[#allocation3 + $0x198] sm:$0xff]
    %v117 = vld [vmem:[#allocation3 + $0x1a0] sm:$0xff]
    %v118 = vld [vmem:[#allocation3 + $0x1a8] sm:$0xff]
    %v119 = vld [vmem:[#allocation3 + $0x1b0] sm:$0xff]
    %v120 = vld [vmem:[#allocation3 + $0x1b8] sm:$0xff]
    %v121 = vld [vmem:[#allocation3 + $0x1c0] sm:$0xff]
    %v122 = vld [vmem:[#allocation3 + $0x1c8] sm:$0xff]
    %v123 = vld [vmem:[#allocation3 + $0x1d0] sm:$0xff]
    %v124 = vld [vmem:[#allocation3 + $0x1d8] sm:$0xff]
    %v125 = vld [vmem:[#allocation3 + $0x1e0] sm:$0xff]
    %v126 = vld [vmem:[#allocation3 + $0x1e8] sm:$0xff]
    %v127 = vld [vmem:[#allocation3 + $0x1f0] sm:$0xff]
    %v128 = vld [vmem:[#allocation3 + $0x1f8] sm:$0xff]
    %v129 = vld [vmem:[#allocation3 + $0x200] sm:$0xff]
    %v130 = vld [vmem:[#allocation3 + $0x208] sm:$0xff]
    %v131 = vld [vmem:[#allocation3 + $0x210] sm:$0xff]
    %v132 = vld [vmem:[#allocation3 + $0x218] sm:$0xff]
    %v133 = vld [vmem:[#allocation3 + $0x220] sm:$0xff]
    %v134 = vld [vmem:[#allocation3 + $0x228] sm:$0xff]
    %v135 = vld [vmem:[#allocation3 + $0x230] sm:$0xff]
    %v136 = vld [vmem:[#allocation3 + $0x238] sm:$0xff]
    %v137 = vld [vmem:[#allocation3 + $0x240] sm:$0xff]
    %v138 = vld [vmem:[#allocation3 + $0x248] sm:$0xff]
    %v139 = vld [vmem:[#allocation3 + $0x250] sm:$0xff]
    %v140 = vld [vmem:[#allocation3 + $0x258] sm:$0xff]
    %v141 = vld [vmem:[#allocation3 + $0x260] sm:$0xff]
    %v142 = vld [vmem:[#allocation3 + $0x268] sm:$0xff]
    %v143 = vld [vmem:[#allocation3 + $0x270] sm:$0xff]
    %v144 = vld [vmem:[#allocation3 + $0x278] sm:$0xff]
    %v145 = vld [vmem:[#allocation3 + $0x280] sm:$0xff]
    %v146 = vld [vmem:[#allocation3 + $0x288] sm:$0xff]
    %v147 = vld [vmem:[#allocation3 + $0x290] sm:$0xff]
    %v148 = vld [vmem:[#allocation3 + $0x298] sm:$0xff]
    %v149 = vld [vmem:[#allocation3 + $0x2a0] sm:$0xff]
    %v150 = vld [vmem:[#allocation3 + $0x2a8] sm:$0xff]
    %v151 = vld [vmem:[#allocation3 + $0x2b0] sm:$0xff]
    %v152 = vld [vmem:[#allocation3 + $0x2b8] sm:$0xff]
    %v153 = vld [vmem:[#allocation3 + $0x2c0] sm:$0xff]
    %v154 = vld [vmem:[#allocation3 + $0x2c8] sm:$0xff]
    %v155 = vld [vmem:[#allocation3 + $0x2d0] sm:$0xff]
    %v156 = vld [vmem:[#allocation3 + $0x2d8] sm:$0xff]
    %v157 = vld [vmem:[#allocation3 + $0x2e0] sm:$0xff]
    %v158 = vld [vmem:[#allocation3 + $0x2e8] sm:$0xff]
    %v159 = vld [vmem:[#allocation3 + $0x2f0] sm:$0xff]
    %v160 = vld [vmem:[#allocation3 + $0x2f8] sm:$0xff]
    %v161 = vld [vmem:[#allocation3 + $0x300] sm:$0xff]
    %v162 = vld [vmem:[#allocation3 + $0x308] sm:$0xff]
    %v163 = vld [vmem:[#allocation3 + $0x310] sm:$0xff]
    %v164 = vld [vmem:[#allocation3 + $0x318] sm:$0xff]
    %v165 = vld [vmem:[#allocation3 + $0x320] sm:$0xff]
    %v166 = vld [vmem:[#allocation3 + $0x328] sm:$0xff]
    %v167 = vld [vmem:[#allocation3 + $0x330] sm:$0xff]
    %v168 = vld [vmem:[#allocation3 + $0x338] sm:$0xff]
    %v169 = vld [vmem:[#allocation3 + $0x340] sm:$0xff]
    %v170 = vld [vmem:[#allocation3 + $0x348] sm:$0xff]
    %v171 = vld [vmem:[#allocation3 + $0x350] sm:$0xff]
    %v172 = vld [vmem:[#allocation3 + $0x358] sm:$0xff]
    %v173 = vld [vmem:[#allocation3 + $0x360] sm:$0xff]
    %v174 = vld [vmem:[#allocation3 + $0x368] sm:$0xff]
    %v175 = vld [vmem:[#allocation3 + $0x370] sm:$0xff]
    %v176 = vld [vmem:[#allocation3 + $0x378] sm:$0xff]
    %v177 = vld [vmem:[#allocation3 + $0x380] sm:$0xff]
    %v178 = vld [vmem:[#allocation3 + $0x388] sm:$0xff]
    %v179 = vld [vmem:[#allocation3 + $0x390] sm:$0xff]
    %v180 = vld [vmem:[#allocation3 + $0x398] sm:$0xff]
    %v181 = vld [vmem:[#allocation3 + $0x3a0] sm:$0xff]
    %v182 = vld [vmem:[#allocation3 + $0x3a8] sm:$0xff]
    %v183 = vld [vmem:[#allocation3 + $0x3b0] sm:$0xff]
    %v184 = vld [vmem:[#allocation3 + $0x3b8] sm:$0xff]
    %v185 = vld [vmem:[#allocation3 + $0x3c0] sm:$0xff]
    %v186 = vld [vmem:[#allocation3 + $0x3c8] sm:$0xff]
    %v187 = vld [vmem:[#allocation3 + $0x3d0] sm:$0xff]
    %v188 = vld [vmem:[#allocation3 + $0x3d8] sm:$0xff]
    %v189 = vld [vmem:[#allocation3 + $0x3e0] sm:$0xff]
    %v190 = vld [vmem:[#allocation3 + $0x3e8] sm:$0xff]
    %v191 = vld [vmem:[#allocation3 + $0x3f0] sm:$0xff]
    %v192 = vld [vmem:[#allocation3 + $0x3f8] sm:$0xff]
    %v193 = vld [vmem:[#allocation6] sm:$0xff]
    %v194 = vld [vmem:[#allocation6 + $0x8] sm:$0xff]
    %v195 = vld [vmem:[#allocation6 + $0x10] sm:$0xff]
    %v196 = vld [vmem:[#allocation6 + $0x18] sm:$0xff]
    %v197 = vld [vmem:[#allocation6 + $0x20] sm:$0xff]
    %v198 = vld [vmem:[#allocation6 + $0x28] sm:$0xff]
    %v199 = vld [vmem:[#allocation6 + $0x30] sm:$0xff]
    %v200 = vld [vmem:[#allocation6 + $0x38] sm:$0xff]
    %v201 = vld [vmem:[#allocation6 + $0x40] sm:$0xff]
    %v202 = vld [vmem:[#allocation6 + $0x48] sm:$0xff]
    %v203 = vld [vmem:[#allocation6 + $0x50] sm:$0xff]
    %v204 = vld [vmem:[#allocation6 + $0x58] sm:$0xff]
    %v205 = vld [vmem:[#allocation6 + $0x60] sm:$0xff]
    %v206 = vld [vmem:[#allocation6 + $0x68] sm:$0xff]
    %v207 = vld [vmem:[#allocation6 + $0x70] sm:$0xff]
    %v208 = vld [vmem:[#allocation6 + $0x78] sm:$0xff]
    %v209 = vld [vmem:[#allocation6 + $0x80] sm:$0xff]
    %v210 = vld [vmem:[#allocation6 + $0x88] sm:$0xff]
    %v211 = vld [vmem:[#allocation6 + $0x90] sm:$0xff]
    %v212 = vld [vmem:[#allocation6 + $0x98] sm:$0xff]
    %v213 = vld [vmem:[#allocation6 + $0xa0] sm:$0xff]
    %v214 = vld [vmem:[#allocation6 + $0xa8] sm:$0xff]
    %v215 = vld [vmem:[#allocation6 + $0xb0] sm:$0xff]
    %v216 = vld [vmem:[#allocation6 + $0xb8] sm:$0xff]
    %v217 = vld [vmem:[#allocation6 + $0xc0] sm:$0xff]
    %v218 = vld [vmem:[#allocation6 + $0xc8] sm:$0xff]
    %v219 = vld [vmem:[#allocation6 + $0xd0] sm:$0xff]
    %v220 = vld [vmem:[#allocation6 + $0xd8] sm:$0xff]
    %v221 = vld [vmem:[#allocation6 + $0xe0] sm:$0xff]
    %v222 = vld [vmem:[#allocation6 + $0xe8] sm:$0xff]
    %v223 = vld [vmem:[#allocation6 + $0xf0] sm:$0xff]
    %v224 = vld [vmem:[#allocation6 + $0xf8] sm:$0xff]
    %v225 = vld [vmem:[#allocation6 + $0x100] sm:$0xff]
    %v226 = vld [vmem:[#allocation6 + $0x108] sm:$0xff]
    %v227 = vld [vmem:[#allocation6 + $0x110] sm:$0xff]
    %v228 = vld [vmem:[#allocation6 + $0x118] sm:$0xff]
    %v229 = vld [vmem:[#allocation6 + $0x120] sm:$0xff]
    %v230 = vld [vmem:[#allocation6 + $0x128] sm:$0xff]
    %v231 = vld [vmem:[#allocation6 + $0x130] sm:$0xff]
    %v232 = vld [vmem:[#allocation6 + $0x138] sm:$0xff]
    %v233 = vld [vmem:[#allocation6 + $0x140] sm:$0xff]
    %v234 = vld [vmem:[#allocation6 + $0x148] sm:$0xff]
    %v235 = vld [vmem:[#allocation6 + $0x150] sm:$0xff]
    %v236 = vld [vmem:[#allocation6 + $0x158] sm:$0xff]
    %v237 = vld [vmem:[#allocation6 + $0x160] sm:$0xff]
    %v238 = vld [vmem:[#allocation6 + $0x168] sm:$0xff]
    %v239 = vld [vmem:[#allocation6 + $0x170] sm:$0xff]
    %v240 = vld [vmem:[#allocation6 + $0x178] sm:$0xff]
    %v241 = vld [vmem:[#allocation6 + $0x180] sm:$0xff]
    %v242 = vld [vmem:[#allocation6 + $0x188] sm:$0xff]
    %v243 = vld [vmem:[#allocation6 + $0x190] sm:$0xff]
    %v244 = vld [vmem:[#allocation6 + $0x198] sm:$0xff]
    %v245 = vld [vmem:[#allocation6 + $0x1a0] sm:$0xff]
    %v246 = vld [vmem:[#allocation6 + $0x1a8] sm:$0xff]
    %v247 = vld [vmem:[#allocation6 + $0x1b0] sm:$0xff]
    %v248 = vld [vmem:[#allocation6 + $0x1b8] sm:$0xff]
    %v249 = vld [vmem:[#allocation6 + $0x1c0] sm:$0xff]
    %v250 = vld [vmem:[#allocation6 + $0x1c8] sm:$0xff]
    %v251 = vld [vmem:[#allocation6 + $0x1d0] sm:$0xff]
    %v252 = vld [vmem:[#allocation6 + $0x1d8] sm:$0xff]
    %v253 = vld [vmem:[#allocation6 + $0x1e0] sm:$0xff]
    %v254 = vld [vmem:[#allocation6 + $0x1e8] sm:$0xff]
    %v255 = vld [vmem:[#allocation6 + $0x1f0] sm:$0xff]
    %v256 = vld [vmem:[#allocation6 + $0x1f8] sm:$0xff]
    %v257 = vld [vmem:[#allocation6 + $0x200] sm:$0xff]
    %v258 = vld [vmem:[#allocation6 + $0x208] sm:$0xff]
    %v259 = vld [vmem:[#allocation6 + $0x210] sm:$0xff]
    %v260 = vld [vmem:[#allocation6 + $0x218] sm:$0xff]
    %v261 = vld [vmem:[#allocation6 + $0x220] sm:$0xff]
    %v262 = vld [vmem:[#allocation6 + $0x228] sm:$0xff]
    %v263 = vld [vmem:[#allocation6 + $0x230] sm:$0xff]
    %v264 = vld [vmem:[#allocation6 + $0x238] sm:$0xff]
    %v265 = vld [vmem:[#allocation6 + $0x240] sm:$0xff]
    %v266 = vld [vmem:[#allocation6 + $0x248] sm:$0xff]
    %v267 = vld [vmem:[#allocation6 + $0x250] sm:$0xff]
    %v268 = vld [vmem:[#allocation6 + $0x258] sm:$0xff]
    %v269 = vld [vmem:[#allocation6 + $0x260] sm:$0xff]
    %v270 = vld [vmem:[#allocation6 + $0x268] sm:$0xff]
    %v271 = vld [vmem:[#allocation6 + $0x270] sm:$0xff]
    %v272 = vld [vmem:[#allocation6 + $0x278] sm:$0xff]
    %v273 = vld [vmem:[#allocation6 + $0x280] sm:$0xff]
    %v274 = vld [vmem:[#allocation6 + $0x288] sm:$0xff]
    %v275 = vld [vmem:[#allocation6 + $0x290] sm:$0xff]
    %v276 = vld [vmem:[#allocation6 + $0x298] sm:$0xff]
    %v277 = vld [vmem:[#allocation6 + $0x2a0] sm:$0xff]
    %v278 = vld [vmem:[#allocation6 + $0x2a8] sm:$0xff]
    %v279 = vld [vmem:[#allocation6 + $0x2b0] sm:$0xff]
    %v280 = vld [vmem:[#allocation6 + $0x2b8] sm:$0xff]
    %v281 = vld [vmem:[#allocation6 + $0x2c0] sm:$0xff]
    %v282 = vld [vmem:[#allocation6 + $0x2c8] sm:$0xff]
    %v283 = vld [vmem:[#allocation6 + $0x2d0] sm:$0xff]
    %v284 = vld [vmem:[#allocation6 + $0x2d8] sm:$0xff]
    %v285 = vld [vmem:[#allocation6 + $0x2e0] sm:$0xff]
    %v286 = vld [vmem:[#allocation6 + $0x2e8] sm:$0xff]
    %v287 = vld [vmem:[#allocation6 + $0x2f0] sm:$0xff]
    %v288 = vld [vmem:[#allocation6 + $0x2f8] sm:$0xff]
    %v289 = vld [vmem:[#allocation6 + $0x300] sm:$0xff]
    %v290 = vld [vmem:[#allocation6 + $0x308] sm:$0xff]
    %v291 = vld [vmem:[#allocation6 + $0x310] sm:$0xff]
    %v292 = vld [vmem:[#allocation6 + $0x318] sm:$0xff]
    %v293 = vld [vmem:[#allocation6 + $0x320] sm:$0xff]
    %v294 = vld [vmem:[#allocation6 + $0x328] sm:$0xff]
    %v295 = vld [vmem:[#allocation6 + $0x330] sm:$0xff]
    %v296 = vld [vmem:[#allocation6 + $0x338] sm:$0xff]
    %v297 = vld [vmem:[#allocation6 + $0x340] sm:$0xff]
    %v298 = vld [vmem:[#allocation6 + $0x348] sm:$0xff]
    %v299 = vld [vmem:[#allocation6 + $0x350] sm:$0xff]
    %v300 = vld [vmem:[#allocation6 + $0x358] sm:$0xff]
    %v301 = vld [vmem:[#allocation6 + $0x360] sm:$0xff]
    %v302 = vld [vmem:[#allocation6 + $0x368] sm:$0xff]
    %v303 = vld [vmem:[#allocation6 + $0x370] sm:$0xff]
    %v304 = vld [vmem:[#allocation6 + $0x378] sm:$0xff]
    %v305 = vld [vmem:[#allocation6 + $0x380] sm:$0xff]
    %v306 = vld [vmem:[#allocation6 + $0x388] sm:$0xff]
    %v307 = vld [vmem:[#allocation6 + $0x390] sm:$0xff]
    %v308 = vld [vmem:[#allocation6 + $0x398] sm:$0xff]
    %v309 = vld [vmem:[#allocation6 + $0x3a0] sm:$0xff]
    %v310 = vld [vmem:[#allocation6 + $0x3a8] sm:$0xff]
    %v311 = vld [vmem:[#allocation6 + $0x3b0] sm:$0xff]
    %v312 = vld [vmem:[#allocation6 + $0x3b8] sm:$0xff]
    %v313 = vld [vmem:[#allocation6 + $0x3c0] sm:$0xff]
    %v314 = vld [vmem:[#allocation6 + $0x3c8] sm:$0xff]
    %v315 = vld [vmem:[#allocation6 + $0x3d0] sm:$0xff]
    %v316 = vld [vmem:[#allocation6 + $0x3d8] sm:$0xff]
    %v317 = vld [vmem:[#allocation6 + $0x3e0] sm:$0xff]
    %v318 = vld [vmem:[#allocation6 + $0x3e8] sm:$0xff]
    %v319 = vld [vmem:[#allocation6 + $0x3f0] sm:$0xff]
    %v320 = vld [vmem:[#allocation6 + $0x3f8] sm:$0xff]
    %v321 = vsub.f32 %v65, %v193
    %v322 = vsub.f32 %v66, %v194
    %v323 = vsub.f32 %v67, %v195
    %v324 = vsub.f32 %v68, %v196
    %v325 = vsub.f32 %v69, %v197
    %v326 = vsub.f32 %v70, %v198
    %v327 = vsub.f32 %v71, %v199
    %v328 = vsub.f32 %v72, %v200
    %v329 = vsub.f32 %v73, %v201
    %v330 = vsub.f32 %v74, %v202
    %v331 = vsub.f32 %v75, %v203
    %v332 = vsub.f32 %v76, %v204
    %v333 = vsub.f32 %v77, %v205
    %v334 = vsub.f32 %v78, %v206
    %v335 = vsub.f32 %v79, %v207
    %v336 = vsub.f32 %v80, %v208
    %v337 = vsub.f32 %v81, %v209
    %v338 = vsub.f32 %v82, %v210
    %v339 = vsub.f32 %v83, %v211
    %v340 = vsub.f32 %v84, %v212
    %v341 = vsub.f32 %v85, %v213
    %v342 = vsub.f32 %v86, %v214
    %v343 = vsub.f32 %v87, %v215
    %v344 = vsub.f32 %v88, %v216
    %v345 = vsub.f32 %v89, %v217
    %v346 = vsub.f32 %v90, %v218
    %v347 = vsub.f32 %v91, %v219
    %v348 = vsub.f32 %v92, %v220
    %v349 = vsub.f32 %v93, %v221
    %v350 = vsub.f32 %v94, %v222
    %v351 = vsub.f32 %v95, %v223
    %v352 = vsub.f32 %v96, %v224
    %v353 = vsub.f32 %v97, %v225
    %v354 = vsub.f32 %v98, %v226
    %v355 = vsub.f32 %v99, %v227
    %v356 = vsub.f32 %v100, %v228
    %v357 = vsub.f32 %v101, %v229
    %v358 = vsub.f32 %v102, %v230
    %v359 = vsub.f32 %v103, %v231
    %v360 = vsub.f32 %v104, %v232
    %v361 = vsub.f32 %v105, %v233
    %v362 = vsub.f32 %v106, %v234
    %v363 = vsub.f32 %v107, %v235
    %v364 = vsub.f32 %v108, %v236
    %v365 = vsub.f32 %v109, %v237
    %v366 = vsub.f32 %v110, %v238
    %v367 = vsub.f32 %v111, %v239
    %v368 = vsub.f32 %v112, %v240
    %v369 = vsub.f32 %v113, %v241
    %v370 = vsub.f32 %v114, %v242
    %v371 = vsub.f32 %v115, %v243
    %v372 = vsub.f32 %v116, %v244
    %v373 = vsub.f32 %v117, %v245
    %v374 = vsub.f32 %v118, %v246
    %v375 = vsub.f32 %v119, %v247
    %v376 = vsub.f32 %v120, %v248
    %v377 = vsub.f32 %v121, %v249
    %v378 = vsub.f32 %v122, %v250
    %v379 = vsub.f32 %v123, %v251
    %v380 = vsub.f32 %v124, %v252
    %v381 = vsub.f32 %v125, %v253
    %v382 = vsub.f32 %v126, %v254
    %v383 = vsub.f32 %v127, %v255
    %v384 = vsub.f32 %v128, %v256
    %v385 = vsub.f32 %v129, %v257
    %v386 = vsub.f32 %v130, %v258
    %v387 = vsub.f32 %v131, %v259
    %v388 = vsub.f32 %v132, %v260
    %v389 = vsub.f32 %v133, %v261
    %v390 = vsub.f32 %v134, %v262
    %v391 = vsub.f32 %v135, %v263
    %v392 = vsub.f32 %v136, %v264
    %v393 = vsub.f32 %v137, %v265
    %v394 = vsub.f32 %v138, %v266
    %v395 = vsub.f32 %v139, %v267
    %v396 = vsub.f32 %v140, %v268
    %v397 = vsub.f32 %v141, %v269
    %v398 = vsub.f32 %v142, %v270
    %v399 = vsub.f32 %v143, %v271
    %v400 = vsub.f32 %v144, %v272
    %v401 = vsub.f32 %v145, %v273
    %v402 = vsub.f32 %v146, %v274
    %v403 = vsub.f32 %v147, %v275
    %v404 = vsub.f32 %v148, %v276
    %v405 = vsub.f32 %v149, %v277
    %v406 = vsub.f32 %v150, %v278
    %v407 = vsub.f32 %v151, %v279
    %v408 = vsub.f32 %v152, %v280
    %v409 = vsub.f32 %v153, %v281
    %v410 = vsub.f32 %v154, %v282
    %v411 = vsub.f32 %v155, %v283
    %v412 = vsub.f32 %v156, %v284
    %v413 = vsub.f32 %v157, %v285
    %v414 = vsub.f32 %v158, %v286
    %v415 = vsub.f32 %v159, %v287
    %v416 = vsub.f32 %v160, %v288
    %v417 = vsub.f32 %v161, %v289
    %v418 = vsub.f32 %v162, %v290
    %v419 = vsub.f32 %v163, %v291
    %v420 = vsub.f32 %v164, %v292
    %v421 = vsub.f32 %v165, %v293
    %v422 = vsub.f32 %v166, %v294
    %v423 = vsub.f32 %v167, %v295
    %v424 = vsub.f32 %v168, %v296
    %v425 = vsub.f32 %v169, %v297
    %v426 = vsub.f32 %v170, %v298
    %v427 = vsub.f32 %v171, %v299
    %v428 = vsub.f32 %v172, %v300
    %v429 = vsub.f32 %v173, %v301
    %v430 = vsub.f32 %v174, %v302
    %v431 = vsub.f32 %v175, %v303
    %v432 = vsub.f32 %v176, %v304
    %v433 = vsub.f32 %v177, %v305
    %v434 = vsub.f32 %v178, %v306
    %v435 = vsub.f32 %v179, %v307
    %v436 = vsub.f32 %v180, %v308
    %v437 = vsub.f32 %v181, %v309
    %v438 = vsub.f32 %v182, %v310
    %v439 = vsub.f32 %v183, %v311
    %v440 = vsub.f32 %v184, %v312
    %v441 = vsub.f32 %v185, %v313
    %v442 = vsub.f32 %v186, %v314
    %v443 = vsub.f32 %v187, %v315
    %v444 = vsub.f32 %v188, %v316
    %v445 = vsub.f32 %v189, %v317
    %v446 = vsub.f32 %v190, %v318
    %v447 = vsub.f32 %v191, %v319
    %v448 = vsub.f32 %v192, %v320
    %v449 = vmul.f32 %v321, %v321
    %v450 = vmul.f32 %v322, %v322
    %v451 = vmul.f32 %v323, %v323
    %v452 = vmul.f32 %v324, %v324
    %v453 = vmul.f32 %v325, %v325
    %v454 = vmul.f32 %v326, %v326
    %v455 = vmul.f32 %v327, %v327
    %v456 = vmul.f32 %v328, %v328
    %v457 = vmul.f32 %v329, %v329
    %v458 = vmul.f32 %v330, %v330
    %v459 = vmul.f32 %v331, %v331
    %v460 = vmul.f32 %v332, %v332
    %v461 = vmul.f32 %v333, %v333
    %v462 = vmul.f32 %v334, %v334
    %v463 = vmul.f32 %v335, %v335
    %v464 = vmul.f32 %v336, %v336
    %v465 = vmul.f32 %v337, %v337
    %v466 = vmul.f32 %v338, %v338
    %v467 = vmul.f32 %v339, %v339
    %v468 = vmul.f32 %v340, %v340
    %v469 = vmul.f32 %v341, %v341
    %v470 = vmul.f32 %v342, %v342
    %v471 = vmul.f32 %v343, %v343
    %v472 = vmul.f32 %v344, %v344
    %v473 = vmul.f32 %v345, %v345
    %v474 = vmul.f32 %v346, %v346
    %v475 = vmul.f32 %v347, %v347
    %v476 = vmul.f32 %v348, %v348
    %v477 = vmul.f32 %v349, %v349
    %v478 = vmul.f32 %v350, %v350
    %v479 = vmul.f32 %v351, %v351
    %v480 = vmul.f32 %v352, %v352
    %v481 = vmul.f32 %v353, %v353
    %v482 = vmul.f32 %v354, %v354
    %v483 = vmul.f32 %v355, %v355
    %v484 = vmul.f32 %v356, %v356
    %v485 = vmul.f32 %v357, %v357
    %v486 = vmul.f32 %v358, %v358
    %v487 = vmul.f32 %v359, %v359
    %v488 = vmul.f32 %v360, %v360
    %v489 = vmul.f32 %v361, %v361
    %v490 = vmul.f32 %v362, %v362
    %v491 = vmul.f32 %v363, %v363
    %v492 = vmul.f32 %v364, %v364
    %v493 = vmul.f32 %v365, %v365
    %v494 = vmul.f32 %v366, %v366
    %v495 = vmul.f32 %v367, %v367
    %v496 = vmul.f32 %v368, %v368
    %v497 = vmul.f32 %v369, %v369
    %v498 = vmul.f32 %v370, %v370
    %v499 = vmul.f32 %v371, %v371
    %v500 = vmul.f32 %v372, %v372
    %v501 = vmul.f32 %v373, %v373
    %v502 = vmul.f32 %v374, %v374
    %v503 = vmul.f32 %v375, %v375
    %v504 = vmul.f32 %v376, %v376
    %v505 = vmul.f32 %v377, %v377
    %v506 = vmul.f32 %v378, %v378
    %v507 = vmul.f32 %v379, %v379
    %v508 = vmul.f32 %v380, %v380
    %v509 = vmul.f32 %v381, %v381
    %v510 = vmul.f32 %v382, %v382
    %v511 = vmul.f32 %v383, %v383
    %v512 = vmul.f32 %v384, %v384
    %v513 = vmul.f32 %v385, %v385
    %v514 = vmul.f32 %v386, %v386
    %v515 = vmul.f32 %v387, %v387
    %v516 = vmul.f32 %v388, %v388
    %v517 = vmul.f32 %v389, %v389
    %v518 = vmul.f32 %v390, %v390
    %v519 = vmul.f32 %v391, %v391
    %v520 = vmul.f32 %v392, %v392
    %v521 = vmul.f32 %v393, %v393
    %v522 = vmul.f32 %v394, %v394
    %v523 = vmul.f32 %v395, %v395
    %v524 = vmul.f32 %v396, %v396
    %v525 = vmul.f32 %v397, %v397
    %v526 = vmul.f32 %v398, %v398
    %v527 = vmul.f32 %v399, %v399
    %v528 = vmul.f32 %v400, %v400
    %v529 = vmul.f32 %v401, %v401
    %v530 = vmul.f32 %v402, %v402
    %v531 = vmul.f32 %v403, %v403
    %v532 = vmul.f32 %v404, %v404
    %v533 = vmul.f32 %v405, %v405
    %v534 = vmul.f32 %v406, %v406
    %v535 = vmul.f32 %v407, %v407
    %v536 = vmul.f32 %v408, %v408
    %v537 = vmul.f32 %v409, %v409
    %v538 = vmul.f32 %v410, %v410
    %v539 = vmul.f32 %v411, %v411
    %v540 = vmul.f32 %v412, %v412
    %v541 = vmul.f32 %v413, %v413
    %v542 = vmul.f32 %v414, %v414
    %v543 = vmul.f32 %v415, %v415
    %v544 = vmul.f32 %v416, %v416
    %v545 = vmul.f32 %v417, %v417
    %v546 = vmul.f32 %v418, %v418
    %v547 = vmul.f32 %v419, %v419
    %v548 = vmul.f32 %v420, %v420
    %v549 = vmul.f32 %v421, %v421
    %v550 = vmul.f32 %v422, %v422
    %v551 = vmul.f32 %v423, %v423
    %v552 = vmul.f32 %v424, %v424
    %v553 = vmul.f32 %v425, %v425
    %v554 = vmul.f32 %v426, %v426
    %v555 = vmul.f32 %v427, %v427
    %v556 = vmul.f32 %v428, %v428
    %v557 = vmul.f32 %v429, %v429
    %v558 = vmul.f32 %v430, %v430
    %v559 = vmul.f32 %v431, %v431
    %v560 = vmul.f32 %v432, %v432
    %v561 = vmul.f32 %v433, %v433
    %v562 = vmul.f32 %v434, %v434
    %v563 = vmul.f32 %v435, %v435
    %v564 = vmul.f32 %v436, %v436
    %v565 = vmul.f32 %v437, %v437
    %v566 = vmul.f32 %v438, %v438
    %v567 = vmul.f32 %v439, %v439
    %v568 = vmul.f32 %v440, %v440
    %v569 = vmul.f32 %v441, %v441
    %v570 = vmul.f32 %v442, %v442
    %v571 = vmul.f32 %v443, %v443
    %v572 = vmul.f32 %v444, %v444
    %v573 = vmul.f32 %v445, %v445
    %v574 = vmul.f32 %v446, %v446
    %v575 = vmul.f32 %v447, %v447
    %v576 = vmul.f32 %v448, %v448
    %v577 = vld [vmem:[#allocation2] sm:$0x1]
    %v578 = vadd.f32 %v449, %v450
    %v579 = vadd.f32 %v578, %v451
    %v580 = vadd.f32 %v579, %v452
    %v581 = vadd.f32 %v580, %v453
    %v582 = vadd.f32 %v581, %v454
    %v583 = vadd.f32 %v582, %v455
    %v584 = vadd.f32 %v583, %v456
    %v585 = vadd.f32 %v584, %v457
    %v586 = vadd.f32 %v585, %v458
    %v587 = vadd.f32 %v586, %v459
    %v588 = vadd.f32 %v587, %v460
    %v589 = vadd.f32 %v588, %v461
    %v590 = vadd.f32 %v589, %v462
    %v591 = vadd.f32 %v590, %v463
    %v592 = vadd.f32 %v591, %v464
    %v593 = vadd.f32 %v592, %v465
    %v594 = vadd.f32 %v593, %v466
    %v595 = vadd.f32 %v594, %v467
    %v596 = vadd.f32 %v595, %v468
    %v597 = vadd.f32 %v596, %v469
    %v598 = vadd.f32 %v597, %v470
    %v599 = vadd.f32 %v598, %v471
    %v600 = vadd.f32 %v599, %v472
    %v601 = vadd.f32 %v600, %v473
    %v602 = vadd.f32 %v601, %v474
    %v603 = vadd.f32 %v602, %v475
    %v604 = vadd.f32 %v603, %v476
    %v605 = vadd.f32 %v604, %v477
    %v606 = vadd.f32 %v605, %v478
    %v607 = vadd.f32 %v606, %v479
    %v608 = vadd.f32 %v607, %v480
    %v609 = vadd.f32 %v608, %v481
    %v610 = vadd.f32 %v609, %v482
    %v611 = vadd.f32 %v610, %v483
    %v612 = vadd.f32 %v611, %v484
    %v613 = vadd.f32 %v612, %v485
    %v614 = vadd.f32 %v613, %v486
    %v615 = vadd.f32 %v614, %v487
    %v616 = vadd.f32 %v615, %v488
    %v617 = vadd.f32 %v616, %v489
    %v618 = vadd.f32 %v617, %v490
    %v619 = vadd.f32 %v618, %v491
    %v620 = vadd.f32 %v619, %v492
    %v621 = vadd.f32 %v620, %v493
    %v622 = vadd.f32 %v621, %v494
    %v623 = vadd.f32 %v622, %v495
    %v624 = vadd.f32 %v623, %v496
    %v625 = vadd.f32 %v624, %v497
    %v626 = vadd.f32 %v625, %v498
    %v627 = vadd.f32 %v626, %v499
    %v628 = vadd.f32 %v627, %v500
    %v629 = vadd.f32 %v628, %v501
    %v630 = vadd.f32 %v629, %v502
    %v631 = vadd.f32 %v630, %v503
    %v632 = vadd.f32 %v631, %v504
    %v633 = vadd.f32 %v632, %v505
    %v634 = vadd.f32 %v633, %v506
    %v635 = vadd.f32 %v634, %v507
    %v636 = vadd.f32 %v635, %v508
    %v637 = vadd.f32 %v636, %v509
    %v638 = vadd.f32 %v637, %v510
    %v639 = vadd.f32 %v638, %v511
    %v640 = vadd.f32 %v639, %v512
    %v641 = vadd.f32 %v640, %v513
    %v642 = vadd.f32 %v641, %v514
    %v643 = vadd.f32 %v642, %v515
    %v644 = vadd.f32 %v643, %v516
    %v645 = vadd.f32 %v644, %v517
    %v646 = vadd.f32 %v645, %v518
    %v647 = vadd.f32 %v646, %v519
    %v648 = vadd.f32 %v647, %v520
    %v649 = vadd.f32 %v648, %v521
    %v650 = vadd.f32 %v649, %v522
    %v651 = vadd.f32 %v650, %v523
    %v652 = vadd.f32 %v651, %v524
    %v653 = vadd.f32 %v652, %v525
    %v654 = vadd.f32 %v653, %v526
    %v655 = vadd.f32 %v654, %v527
    %v656 = vadd.f32 %v655, %v528
    %v657 = vadd.f32 %v656, %v529
    %v658 = vadd.f32 %v657, %v530
    %v659 = vadd.f32 %v658, %v531
    %v660 = vadd.f32 %v659, %v532
    %v661 = vadd.f32 %v660, %v533
    %v662 = vadd.f32 %v661, %v534
    %v663 = vadd.f32 %v662, %v535
    %v664 = vadd.f32 %v663, %v536
    %v665 = vadd.f32 %v664, %v537
    %v666 = vadd.f32 %v665, %v538
    %v667 = vadd.f32 %v666, %v539
    %v668 = vadd.f32 %v667, %v540
    %v669 = vadd.f32 %v668, %v541
    %v670 = vadd.f32 %v669, %v542
    %v671 = vadd.f32 %v670, %v543
    %v672 = vadd.f32 %v671, %v544
    %v673 = vadd.f32 %v672, %v545
    %v674 = vadd.f32 %v673, %v546
    %v675 = vadd.f32 %v674, %v547
    %v676 = vadd.f32 %v675, %v548
    %v677 = vadd.f32 %v676, %v549
    %v678 = vadd.f32 %v677, %v550
    %v679 = vadd.f32 %v678, %v551
    %v680 = vadd.f32 %v679, %v552
    %v681 = vadd.f32 %v680, %v553
    %v682 = vadd.f32 %v681, %v554
    %v683 = vadd.f32 %v682, %v555
    %v684 = vadd.f32 %v683, %v556
    %v685 = vadd.f32 %v684, %v557
    %v686 = vadd.f32 %v685, %v558
    %v687 = vadd.f32 %v686, %v559
    %v688 = vadd.f32 %v687, %v560
    %v689 = vadd.f32 %v688, %v561
    %v690 = vadd.f32 %v689, %v562
    %v691 = vadd.f32 %v690, %v563
    %v692 = vadd.f32 %v691, %v564
    %v693 = vadd.f32 %v692, %v565
    %v694 = vadd.f32 %v693, %v566
    %v695 = vadd.f32 %v694, %v567
    %v696 = vadd.f32 %v695, %v568
    %v697 = vadd.f32 %v696, %v569
    %v698 = vadd.f32 %v697, %v570
    %v699 = vadd.f32 %v698, %v571
    %v700 = vadd.f32 %v699, %v572
    %v701 = vadd.f32 %v700, %v573
    %v702 = vadd.f32 %v701, %v574
    %v703 = vadd.f32 %v702, %v575
    %v704 = vadd.f32 %v703, %v576
    %v705 = vrot.slane %v704, 4
    %v706 = vadd.f32 %v704, %v705
    %v707 = vrot.slane %v706, 2
    %v708 = vadd.f32 %v706, %v707
    %v709 = vrot.slane %v708, 1
    %v710 = vadd.f32 %v708, %v709
    %v711 = vadd.f32 %v577, %v710
    %712 = vst [vmem:[#allocation2] sm:$0x1] %v711
    // Predicated region
    $region22: #{tpu_custom_call.1} parent=1 // pred_check
      %p713 = pneg %p60
    $region23: #{tpu_custom_call.1} parent=1 // pred_check_branch
      %715 = sbr.rel (%p713) target = $region25
    $region24: #{tpu_custom_call.1} parent=1 // pred_region
      %v716 = vld [vmem:[#allocation2] sm:$0x1]
      %717 = vst [vmem:[#allocation8] sm:$0x1] %v716
    $region25: #{tpu_custom_call.1} parent=1 // pred_fallthru
      _
    // Predicated region
    $region26: #{tpu_custom_call.1} parent=1 // pred_check
      _
    $region27: #{tpu_custom_call.1} parent=1 // pred_check_branch
      %719 = sbr.rel (0) target = $region29
    $region28: #{tpu_custom_call.1} parent=1 // pred_region
      %s721 = ssub.s32 16, 16
      %722 = vsyncadd [#allocation5], %s721
      %s724 = sshll.u32 [#allocation8], 4
      %s725 = int_to_ptr.vmem [resolvable:$true] %s724
      %727 = dma.vmem_to_hbm [thread:$0]  %s725, 16, %s2, [#allocation5]
    $region29: #{tpu_custom_call.1} parent=1 // pred_fallthru
      _
    // Predicated region
    $region30: #{tpu_custom_call.1} parent=1 // pred_check
      _
    $region31: #{tpu_custom_call.1} parent=1 // pred_check_branch
      %729 = sbr.rel (0) target = $region33
    $region32: #{tpu_custom_call.1} parent=1 // pred_region
      %730 = dma.done [#allocation5], 16
    $region33: #{tpu_custom_call.1} parent=1 // pred_fallthru
      _
    %731 = vsyncpa [#allocation4], 1
    %732 = vsyncpa [#allocation7], 1
    %733 = vsyncpa [#allocation5], 1

</llo_original>
